<compile_context>
chip_gen: v7x
topology: tpu7x:2x2x1
jax: 0.10.0
libtpu: 0.0.40
codegen_flags: <defaults>
</compile_context>

<pallas_src>
import functools

import jax
import jax.numpy as jnp
from jax import lax
from jax.experimental import pallas as pl
from jax.experimental.pallas import tpu as pltpu


def _vision_head_kernel(x_ref, w1_ref, b1_ref, w2_ref, b2_ref, o_ref, h_ref, acc_ref):
    j = pl.program_id(1)
    k = pl.program_id(2)

    # First GEMM + exact GELU for this hidden chunk; computed once per row tile
    # (at j == 0) and cached in VMEM for all subsequent output-column tiles j.
    @pl.when(j == 0)
    def _():
        h = jnp.dot(x_ref[...], w1_ref[...], preferred_element_type=jnp.float32)
        h = h + b1_ref[...].astype(jnp.float32)
        # Exact GELU to match torch.nn.GELU() default (approximate='none'):
        #   gelu(x) = 0.5 * x * (1 + erf(x / sqrt(2)))
        h = 0.5 * h * (1.0 + lax.erf(h * 0.7071067811865476))
        h_ref[k] = h.astype(h_ref.dtype)

    @pl.when(k == 0)
    def _():
        acc_ref[...] = jnp.zeros_like(acc_ref)

    # acc += h_chunk @ W2[chunk, j-tile]  (f32 accumulation on the MXU)
    acc_ref[...] += jnp.dot(h_ref[k], w2_ref[...], preferred_element_type=jnp.float32)

    @pl.when(k == pl.num_programs(2) - 1)
    def _():
        o_ref[...] = (acc_ref[...] + b2_ref[...].astype(jnp.float32)).astype(o_ref.dtype)


def _round_up(n, m):
    return (n + m - 1) // m * m


@functools.partial(jax.jit, static_argnames=("tm", "tn", "th"))
def vision_head_forward(x, w1, b1, w2, b2, *, tm=256, tn=1024, th=512):
    """Fused Linear -> GELU(exact erf) -> Linear.

    x:  [M, n_embed]
    w1: [n_embed, image_token_embed]   (transposed vs. torch Linear.weight)
    b1: [image_token_embed]
    w2: [image_token_embed, image_token_size]
    b2: [image_token_size]
    returns [M, image_token_size]
    """
    M, n_embed = x.shape
    E = w1.shape[1]   # image_token_embed (hidden)
    V = w2.shape[1]   # image_token_size  (output / "vocab")

    b1 = b1.reshape(1, E)
    b2 = b2.reshape(1, V)

    # Hardware-aligned tile sizes (sublane multiple of 8, lane multiple of 128),
    # clamped to the (padded) problem; small dims use the full extent.
    tm = max(8, (tm // 8) * 8)
    tn = max(128, (tn // 128) * 128)
    th = max(128, (th // 128) * 128)

    tm_eff = min(tm, _round_up(M, 8))
    th_eff = E if E <= th else th          # full hidden if it is small
    tn_eff = V if V <= tn else tn          # full output width if it is small

    Mp = _round_up(M, tm_eff)
    Ep = _round_up(E, th_eff)
    Vp = _round_up(V, tn_eff)

    # Zero-padding is exact: padded hidden columns give h = gelu(0 + 0) = 0 and
    # the matching W2 rows are zero -> no contribution; padded rows / output
    # columns are sliced off at the end.
    if Mp != M:
        x = jnp.pad(x, ((0, Mp - M), (0, 0)))
    if Ep != E:
        w1 = jnp.pad(w1, ((0, 0), (0, Ep - E)))
        b1 = jnp.pad(b1, ((0, 0), (0, Ep - E)))
        w2 = jnp.pad(w2, ((0, Ep - E), (0, 0)))
    if Vp != V:
        w2 = jnp.pad(w2, ((0, 0), (0, Vp - V)))
        b2 = jnp.pad(b2, ((0, 0), (0, Vp - V)))

    n_k = Ep // th_eff
    grid = (Mp // tm_eff, Vp // tn_eff, n_k)

    h_dtype = w2.dtype   # dtype fed to the second MXU matmul

    # W1 / b1 are only consumed while j == 0; for j > 0 pin their block index
    # so the pipeliner stops re-streaming W1 from HBM for every output tile.
    def w1_map(i, j, k):
        return (0, jnp.where(j == 0, k, 0))

    def b1_map(i, j, k):
        return (0, jnp.where(j == 0, k, 0))

    # Explicit VMEM budget (double-buffered tiles + h cache + f32 accumulator).
    x_is = x.dtype.itemsize
    w_is = w1.dtype.itemsize
    h_is = jnp.dtype(h_dtype).itemsize
    vmem_need = (
        2 * tm_eff * n_embed * x_is        # x tile (double buffered)
        + 2 * n_embed * th_eff * w_is      # W1 chunk
        + 2 * th_eff * w_is                # b1 chunk
        + 2 * th_eff * tn_eff * w_is       # W2 chunk
        + 2 * tn_eff * w_is                # b2 chunk
        + 2 * tm_eff * tn_eff * x_is       # out tile
        + n_k * tm_eff * th_eff * h_is     # cached hidden activations
        + tm_eff * tn_eff * 4              # f32 accumulator
    )
    vmem_limit = int(min(max(vmem_need + (8 << 20), 16 << 20), 100 << 20))

    cost = pl.CostEstimate(
        flops=int(2 * M * n_embed * E + 2 * M * E * V),
        transcendentals=int(M * E),
        bytes_accessed=int(
            Mp * n_embed * x_is
            + (n_embed * Ep + Ep + Ep * Vp + Vp) * w_is
            + Mp * Vp * x_is
        ),
    )

    out = pl.pallas_call(
        _vision_head_kernel,
        out_shape=jax.ShapeDtypeStruct((Mp, Vp), x.dtype),
        grid_spec=pltpu.PrefetchScalarGridSpec(
            num_scalar_prefetch=0,
            grid=grid,
            in_specs=[
                pl.BlockSpec((tm_eff, n_embed), lambda i, j, k: (i, 0)),   # x rows
                pl.BlockSpec((n_embed, th_eff), w1_map),                   # W1 hidden slab
                pl.BlockSpec((1, th_eff), b1_map),                         # b1 slab
                pl.BlockSpec((th_eff, tn_eff), lambda i, j, k: (k, j)),    # W2 slab
                pl.BlockSpec((1, tn_eff), lambda i, j, k: (0, j)),         # b2 slab
            ],
            out_specs=pl.BlockSpec((tm_eff, tn_eff), lambda i, j, k: (i, j)),
            scratch_shapes=[
                pltpu.VMEM((n_k, tm_eff, th_eff), h_dtype),   # cached GELU(x@W1+b1)
                pltpu.VMEM((tm_eff, tn_eff), jnp.float32),    # output accumulator
            ],
        ),
        compiler_params=pltpu.CompilerParams(
            # j must be sequential per core: the h cache is filled at j == 0 and
            # reused for j > 0 of the same row tile.  Row tiles (i) are
            # independent and safe to shard across TensorCores.
            dimension_semantics=("parallel", "arbitrary", "arbitrary"),
            vmem_limit_bytes=vmem_limit,
        ),
        cost_estimate=cost,
    )(x, w1, b1, w2, b2)

    return out[:M, :V]


def _reference(x, w1, b1, w2, b2):
    h = x.astype(jnp.float32) @ w1.astype(jnp.float32) + b1.astype(jnp.float32)
    h = jax.nn.gelu(h, approximate=False)
    return (h @ w2.astype(jnp.float32) + b2.astype(jnp.float32)).astype(x.dtype)


def _make_params(key, n_embed, E, V, dtype=jnp.float32):
    kw1, kb1, kw2, kb2 = jax.random.split(key, 4)
    w1 = jax.random.normal(kw1, (n_embed, E), dtype=dtype) * 0.02
    b1 = jax.random.normal(kb1, (E,), dtype=dtype) * 0.01
    w2 = jax.random.normal(kw2, (E, V), dtype=dtype) * 0.02
    b2 = jax.random.normal(kb2, (V,), dtype=dtype) * 0.01
    return w1, b1, w2, b2


if __name__ == "__main__":
    key = jax.random.PRNGKey(0)
    kx, kp = jax.random.split(key, 2)

    # Small shapes consistent with the module:
    #   n_embed=32, image_token_embed=64, image_token_size=128, batch=2, seq=8
    batch, seq = 2, 8
    n_embed, image_token_embed, image_token_size = 32, 64, 128
    M = batch * seq

    w1, b1, w2, b2 = _make_params(kp, n_embed, image_token_embed, image_token_size)
    x = jax.random.normal(kx, (M, n_embed), dtype=jnp.float32)

    out = vision_head_forward(x, w1, b1, w2, b2)
    jax.block_until_ready(out)
    ref = _reference(x, w1, b1.reshape(1, -1), w2, b2.reshape(1, -1))
    assert out.shape == (M, image_token_size), out.shape
    assert jnp.allclose(out, ref, atol=1e-4, rtol=1e-4), float(jnp.max(jnp.abs(out - ref)))

    # Ragged row count (exercises the padding / tail-handling path).
    M2 = 13
    x2 = jax.random.normal(kx, (M2, n_embed), dtype=jnp.float32)
    out2 = vision_head_forward(x2, w1, b1, w2, b2)
    jax.block_until_ready(out2)
    ref2 = _reference(x2, w1, b1.reshape(1, -1), w2, b2.reshape(1, -1))
    assert out2.shape == (M2, image_token_size), out2.shape
    assert jnp.allclose(out2, ref2, atol=1e-4, rtol=1e-4), float(jnp.max(jnp.abs(out2 - ref2)))

    # Multi-tile grid (i=2, j=2, k=2): exercises the h-cache across output
    # tiles, the conditional W1 index_map and the f32 accumulator reduction.
    E3, V3, M3 = 256, 256, 16
    w1c, b1c, w2c, b2c = _make_params(kp, n_embed, E3, V3)
    x3 = jax.random.normal(kx, (M3, n_embed), dtype=jnp.float32)
    out3 = vision_head_forward(x3, w1c, b1c, w2c, b2c, tm=8, tn=128, th=128)
    jax.block_until_ready(out3)
    ref3 = _reference(x3, w1c, b1c.reshape(1, -1), w2c, b2c.reshape(1, -1))
    assert out3.shape == (M3, V3), out3.shape
    assert jnp.allclose(out3, ref3, atol=1e-4, rtol=1e-4), float(jnp.max(jnp.abs(out3 - ref3)))

    print("KERNEL_OK")
</pallas_src>

<mosaic_0001>
module attributes {stable_mosaic.version = 11 : i64} {
  func.func @_vision_head_kernel(%arg0: i32, %arg1: i32, %arg2: i32, %arg3: memref<16x32xf32, #tpu.memory_space<vmem>>, %arg4: memref<32x64xf32, #tpu.memory_space<vmem>>, %arg5: memref<1x64xf32, #tpu.memory_space<vmem>>, %arg6: memref<64x128xf32, #tpu.memory_space<vmem>>, %arg7: memref<1x128xf32, #tpu.memory_space<vmem>>, %arg8: memref<16x128xf32, #tpu.memory_space<vmem>>, %arg9: memref<1x16x64xf32, #tpu.memory_space<vmem>>, %arg10: memref<16x128xf32, #tpu.memory_space<vmem>>) attributes {dimension_semantics = [#tpu.dimension_semantics<parallel>, #tpu.dimension_semantics<arbitrary>, #tpu.dimension_semantics<arbitrary>], iteration_bounds = array<i64: 1, 1, 1>, scalar_prefetch = 0 : i64, scratch_operands = 2 : i64, tpu.core_type = #tpu.core_type<tc>, window_params = [{transform_indices = @transform_0, window_bounds = array<i64: 16, 32>}, {transform_indices = @transform_1, window_bounds = array<i64: 32, 64>}, {transform_indices = @transform_2, window_bounds = array<i64: 1, 64>}, {transform_indices = @transform_3, window_bounds = array<i64: 64, 128>}, {transform_indices = @transform_4, window_bounds = array<i64: 1, 128>}, {transform_indices = @transform_5, window_bounds = array<i64: 16, 128>}]} {
    %c0_i32 = arith.constant 0 : i32
    %0 = arith.cmpi eq, %arg1, %c0_i32 : i32
    %1 = arith.extui %0 : i1 to i32
    %c0_i32_0 = arith.constant 0 : i32
    %2 = arith.cmpi ne, %1, %c0_i32_0 : i32
    scf.if %2 {
      %c0_12 = arith.constant 0 : index
      %c0_13 = arith.constant 0 : index
      %17 = vector.load %arg3[%c0_12, %c0_13] : memref<16x32xf32, #tpu.memory_space<vmem>>, vector<16x32xf32>
      %c0_14 = arith.constant 0 : index
      %c0_15 = arith.constant 0 : index
      %18 = vector.load %arg4[%c0_14, %c0_15] : memref<32x64xf32, #tpu.memory_space<vmem>>, vector<32x64xf32>
      %cst_16 = arith.constant dense<0.000000e+00> : vector<16x64xf32>
      %19 = tpu.matmul %17, %18, %cst_16 {dimension_numbers = #tpu.dot_dimension_numbers<[1], [0], [0], [1], [0, 0, 1, 1], [], []>} : vector<16x32xf32>, vector<32x64xf32>, vector<16x64xf32> -> vector<16x64xf32>
      %c0_17 = arith.constant 0 : index
      %c0_18 = arith.constant 0 : index
      %20 = vector.load %arg5[%c0_17, %c0_18] : memref<1x64xf32, #tpu.memory_space<vmem>>, vector<1x64xf32>
      %21 = vector.broadcast %20 : vector<1x64xf32> to vector<16x64xf32>
      %22 = arith.addf %19, %21 : vector<16x64xf32>
      %cst_19 = arith.constant 5.000000e-01 : f32
      %23 = vector.broadcast %cst_19 : f32 to vector<16x64xf32>
      %24 = arith.mulf %23, %22 : vector<16x64xf32>
      %cst_20 = arith.constant 0.707106769 : f32
      %25 = vector.broadcast %cst_20 : f32 to vector<16x64xf32>
      %26 = arith.mulf %22, %25 : vector<16x64xf32>
      %27 = math.erf %26 : vector<16x64xf32>
      %cst_21 = arith.constant 1.000000e+00 : f32
      %28 = vector.broadcast %cst_21 : f32 to vector<16x64xf32>
      %29 = arith.addf %28, %27 : vector<16x64xf32>
      %30 = arith.mulf %24, %29 : vector<16x64xf32>
      %31 = arith.index_cast %arg2 : i32 to index
      %c0_22 = arith.constant 0 : index
      %c0_23 = arith.constant 0 : index
      %32 = vector.load %arg9[%31, %c0_22, %c0_23] : memref<1x16x64xf32, #tpu.memory_space<vmem>>, vector<1x16x64xf32>
      %33 = vector.shape_cast %32 : vector<1x16x64xf32> to vector<16x64xf32>
      %34 = vector.shape_cast %30 : vector<16x64xf32> to vector<1x16x64xf32>
      tpu.vector_store %arg9[%31, %c0_22, %c0_23], %34 {strides = array<i32>} : memref<1x16x64xf32, #tpu.memory_space<vmem>>, vector<1x16x64xf32>,
    } else {
    }
    %c0_i32_1 = arith.constant 0 : i32
    %3 = arith.cmpi eq, %arg2, %c0_i32_1 : i32
    %4 = arith.extui %3 : i1 to i32
    %c0_i32_2 = arith.constant 0 : i32
    %5 = arith.cmpi ne, %4, %c0_i32_2 : i32
    scf.if %5 {
      %cst_12 = arith.constant 0.000000e+00 : f32
      %17 = vector.broadcast %cst_12 : f32 to vector<16x128xf32>
      %c0_13 = arith.constant 0 : index
      %c0_14 = arith.constant 0 : index
      %18 = vector.load %arg10[%c0_13, %c0_14] : memref<16x128xf32, #tpu.memory_space<vmem>>, vector<16x128xf32>
      tpu.vector_store %arg10[%c0_13, %c0_14], %17 {strides = array<i32>} : memref<16x128xf32, #tpu.memory_space<vmem>>, vector<16x128xf32>,
    } else {
    }
    %c0 = arith.constant 0 : index
    %c0_3 = arith.constant 0 : index
    %6 = vector.load %arg10[%c0, %c0_3] : memref<16x128xf32, #tpu.memory_space<vmem>>, vector<16x128xf32>
    %7 = arith.index_cast %arg2 : i32 to index
    %c0_4 = arith.constant 0 : index
    %c0_5 = arith.constant 0 : index
    %8 = vector.load %arg9[%7, %c0_4, %c0_5] : memref<1x16x64xf32, #tpu.memory_space<vmem>>, vector<1x16x64xf32>
    %9 = vector.shape_cast %8 : vector<1x16x64xf32> to vector<16x64xf32>
    %c0_6 = arith.constant 0 : index
    %c0_7 = arith.constant 0 : index
    %10 = vector.load %arg6[%c0_6, %c0_7] : memref<64x128xf32, #tpu.memory_space<vmem>>, vector<64x128xf32>
    %cst = arith.constant dense<0.000000e+00> : vector<16x128xf32>
    %11 = tpu.matmul %9, %10, %cst {dimension_numbers = #tpu.dot_dimension_numbers<[1], [0], [0], [1], [0, 0, 1, 1], [], []>} : vector<16x64xf32>, vector<64x128xf32>, vector<16x128xf32> -> vector<16x128xf32>
    %12 = arith.addf %6, %11 : vector<16x128xf32>
    %c0_8 = arith.constant 0 : index
    %c0_9 = arith.constant 0 : index
    %13 = vector.load %arg10[%c0_8, %c0_9] : memref<16x128xf32, #tpu.memory_space<vmem>>, vector<16x128xf32>
    tpu.vector_store %arg10[%c0_8, %c0_9], %12 {strides = array<i32>} : memref<16x128xf32, #tpu.memory_space<vmem>>, vector<16x128xf32>,
    %c0_i32_10 = arith.constant 0 : i32
    %14 = arith.cmpi eq, %arg2, %c0_i32_10 : i32
    %15 = arith.extui %14 : i1 to i32
    %c0_i32_11 = arith.constant 0 : i32
    %16 = arith.cmpi ne, %15, %c0_i32_11 : i32
    scf.if %16 {
      %c0_12 = arith.constant 0 : index
      %c0_13 = arith.constant 0 : index
      %17 = vector.load %arg10[%c0_12, %c0_13] : memref<16x128xf32, #tpu.memory_space<vmem>>, vector<16x128xf32>
      %c0_14 = arith.constant 0 : index
      %c0_15 = arith.constant 0 : index
      %18 = vector.load %arg7[%c0_14, %c0_15] : memref<1x128xf32, #tpu.memory_space<vmem>>, vector<1x128xf32>
      %19 = vector.broadcast %18 : vector<1x128xf32> to vector<16x128xf32>
      %20 = arith.addf %17, %19 : vector<16x128xf32>
      %c0_16 = arith.constant 0 : index
      %c0_17 = arith.constant 0 : index
      %21 = vector.load %arg8[%c0_16, %c0_17] : memref<16x128xf32, #tpu.memory_space<vmem>>, vector<16x128xf32>
      tpu.vector_store %arg8[%c0_16, %c0_17], %20 {strides = array<i32>} : memref<16x128xf32, #tpu.memory_space<vmem>>, vector<16x128xf32>,
    } else {
    }
    return
  }
  func.func @transform_0(%arg0: i32, %arg1: i32, %arg2: i32) -> (i32, i32) {
    %c0_i32 = arith.constant 0 : i32
    %c0_i32_0 = arith.constant 0 : i32
    return %arg0, %c0_i32 : i32, i32
  }
  func.func @transform_1(%arg0: i32, %arg1: i32, %arg2: i32) -> (i32, i32) {
    %c0_i32 = arith.constant 0 : i32
    %0 = arith.cmpi eq, %arg1, %c0_i32 : i32
    %c0_i32_0 = arith.constant 0 : i32
    %1 = arith.select %0, %arg2, %c0_i32_0 : i32
    %c0_i32_1 = arith.constant 0 : i32
    %c0_i32_2 = arith.constant 0 : i32
    return %c0_i32_1, %1 : i32, i32
  }
  func.func @transform_2(%arg0: i32, %arg1: i32, %arg2: i32) -> (i32, i32) {
    %c0_i32 = arith.constant 0 : i32
    %0 = arith.cmpi eq, %arg1, %c0_i32 : i32
    %c0_i32_0 = arith.constant 0 : i32
    %1 = arith.select %0, %arg2, %c0_i32_0 : i32
    %c0_i32_1 = arith.constant 0 : i32
    %c0_i32_2 = arith.constant 0 : i32
    return %c0_i32_1, %1 : i32, i32
  }
  func.func @transform_3(%arg0: i32, %arg1: i32, %arg2: i32) -> (i32, i32) {
    %c0_i32 = arith.constant 0 : i32
    return %arg2, %arg1 : i32, i32
  }
  func.func @transform_4(%arg0: i32, %arg1: i32, %arg2: i32) -> (i32, i32) {
    %c0_i32 = arith.constant 0 : i32
    %c0_i32_0 = arith.constant 0 : i32
    return %c0_i32, %arg1 : i32, i32
  }
  func.func @transform_5(%arg0: i32, %arg1: i32, %arg2: i32) -> (i32, i32) {
    %c0_i32 = arith.constant 0 : i32
    return %arg0, %arg1 : i32, i32
  }
}

</mosaic_0001>

<llo_original>
// kernel: vision_head_forward.1
$region0: #{vision_head_forward.1}
  #allocation0 [shape = 'u32[]', space=smem, size = 0x4, offset = 0x4, fixed_abs, tag = 'smem constant byte address 0x4 - core index']
  #allocation1 [shape = 'u32[144,128]{1,0:T(1,128)}', space=vmem, size = 0x12000, scoped, tag = 'internal scratch']
  #allocation2 [shape = 'f32[1,16,64]{2,1,0:T(8,128)}', space=vmem, size = 0x2000, scoped, tag = 'scratch operand']
  #allocation3 [shape = 'f32[16,128]{1,0:T(8,128)}', space=vmem, size = 0x2000, scoped, tag = 'scratch operand']
  %s0 = inlined_call_operand.hbm [shape: f32[16,32], index: 0, kind: input, shape index: {}]
  %s1 = inlined_call_operand.hbm [shape: f32[32,64], index: 1, kind: input, shape index: {}]
  %s2 = inlined_call_operand.vmem [shape: f32[1,64], index: 2, kind: input, shape index: {}]
  %s3 = inlined_call_operand.hbm [shape: f32[64,128], index: 3, kind: input, shape index: {}]
  %s4 = inlined_call_operand.vmem [shape: f32[1,128], index: 4, kind: input, shape index: {}]
  %s5 = inlined_call_operand.hbm [shape: f32[16,128], index: 5, kind: output, shape index: {}]
  %s6 = sld [smem:[#allocation0]]
  $region54: #{vision_head_forward.1} parent=0
    _
  %s8 = ssub.s32 1, %s6
  %s9 = scalar_select 0, %s8, %s6
  $region1: #{vision_head_forward.1} parent=0
    #allocation4 [shape = 'u8[8192]{0}', space=vmem, size = 0x2000, scoped, tag = 'input window, operand 0, single buffered']
    #allocation5 [shape = 's32[1]{0}', space=sflag, size = 0x4, scoped, tag = 'scoped memory for vision_head_forward.1']
    #allocation6 [shape = 's32[1]{0}', space=sflag, size = 0x4, scoped, tag = 'scoped memory for vision_head_forward.1']
    #allocation7 [shape = 'u8[16384]{0}', space=vmem, size = 0x4000, scoped, tag = 'input window, operand 1, single buffered']
    #allocation8 [shape = 's32[1]{0}', space=sflag, size = 0x4, scoped, tag = 'scoped memory for vision_head_forward.1']
    #allocation9 [shape = 'u8[32768]{0}', space=vmem, size = 0x8000, scoped, tag = 'input window, operand 3, single buffered']
    #allocation10 [shape = 'u8[8192]{0}', space=vmem, size = 0x2000, scoped, tag = 'output window, operand 0, single buffered']
    %10 = vsyncpa [#allocation5], 0
    %11 = vsyncpa [#allocation8], 0
    %12 = vsyncpa [#allocation6], 0
    // Predicated region
    $region2: #{vision_head_forward.1} parent=1 // pred_check
      _
    $region3: #{vision_head_forward.1} parent=1 // pred_check_branch
      %14 = sbr.rel (0) target = $region5
    $region4: #{vision_head_forward.1} parent=1 // pred_region
      %s16 = ssub.s32 256, 256
      %17 = vsyncadd [#allocation5], %s16
      %s18 = sshll.u32 [#allocation4], 4
      %s19 = int_to_ptr.vmem [resolvable:$true] %s18
      %24 = dma.hbm_to_vmem [thread:$0]  %s0, 256, %s19, [#allocation5], 128, 128, 8
    $region5: #{vision_head_forward.1} parent=1 // pred_fallthru
      _
    // Predicated region
    $region6: #{vision_head_forward.1} parent=1 // pred_check
      _
    $region7: #{vision_head_forward.1} parent=1 // pred_check_branch
      %26 = sbr.rel (0) target = $region9
    $region8: #{vision_head_forward.1} parent=1 // pred_region
      %p27 = scmp.eq.s32.totalorder 0, 0
      %s28 = scalar_select %p27, 0, 0
      %s30 = ssub.s32 512, 512
      %31 = vsyncadd [#allocation8], %s30
      %s32 = smul.addr %s28, 128
      %s33 = scalar_lea.hbm %s1, %s32
      %s34 = sshll.u32 [#allocation7], 4
      %s35 = int_to_ptr.vmem [resolvable:$true] %s34
      %40 = dma.hbm_to_vmem [thread:$0]  %s33, 512, %s35, [#allocation8], 128, 128, 8
    $region9: #{vision_head_forward.1} parent=1 // pred_fallthru
      _
    // Predicated region
    $region10: #{vision_head_forward.1} parent=1 // pred_check
      _
    $region11: #{vision_head_forward.1} parent=1 // pred_check_branch
      %42 = sbr.rel (0) target = $region13
    $region12: #{vision_head_forward.1} parent=1 // pred_region
      %p43 = scmp.eq.s32.totalorder 0, 0
      %s44 = scalar_select %p43, 0, 0
      %p45 = scmp.lt.s32.totalorder %s44, 0
      %s46 = scalar_select %p45, %s44, 0
      %s47 = scalar_lea.vmem %s2, %s46
      %p48 = scmp.eq.s32.totalorder 0, 0
      %s49 = scalar_select %p48, 0, 0
    $region13: #{vision_head_forward.1} parent=1 // pred_fallthru
      _
    // Predicated region
    $region14: #{vision_head_forward.1} parent=1 // pred_check
      _
    $region15: #{vision_head_forward.1} parent=1 // pred_check_branch
      %51 = sbr.rel (0) target = $region17
    $region16: #{vision_head_forward.1} parent=1 // pred_region
      %s53 = ssub.s32 1024, 1024
      %54 = vsyncadd [#allocation8], %s53
      %s55 = sshll.u32 [#allocation9], 4
      %s56 = int_to_ptr.vmem [resolvable:$true] %s55
      %61 = dma.hbm_to_vmem [thread:$0]  %s3, 1024, %s56, [#allocation8], 128, 128, 8
    $region17: #{vision_head_forward.1} parent=1 // pred_fallthru
      _
    // Predicated region
    $region18: #{vision_head_forward.1} parent=1 // pred_check
      _
    $region19: #{vision_head_forward.1} parent=1 // pred_check_branch
      %63 = sbr.rel (0) target = $region21
    $region20: #{vision_head_forward.1} parent=1 // pred_region
      _
    $region21: #{vision_head_forward.1} parent=1 // pred_fallthru
      _
    // Predicated region
    $region22: #{vision_head_forward.1} parent=1 // pred_check
      _
    $region23: #{vision_head_forward.1} parent=1 // pred_check_branch
      %65 = sbr.rel (0) target = $region25
    $region24: #{vision_head_forward.1} parent=1 // pred_region
      %66 = dma.done [#allocation5], 256
    $region25: #{vision_head_forward.1} parent=1 // pred_fallthru
      _
    // Predicated region
    $region26: #{vision_head_forward.1} parent=1 // pred_check
      _
    $region27: #{vision_head_forward.1} parent=1 // pred_check_branch
      %68 = sbr.rel (0) target = $region29
    $region28: #{vision_head_forward.1} parent=1 // pred_region
      %69 = dma.done [#allocation8], 512
    $region29: #{vision_head_forward.1} parent=1 // pred_fallthru
      _
    // Predicated region
    $region30: #{vision_head_forward.1} parent=1 // pred_check
      _
    $region31: #{vision_head_forward.1} parent=1 // pred_check_branch
      %71 = sbr.rel (0) target = $region33
    $region32: #{vision_head_forward.1} parent=1 // pred_region
      %72 = dma.done [#allocation8], 1024
    $region33: #{vision_head_forward.1} parent=1 // pred_fallthru
      _
    %p73 = scmp.eq.s32.totalorder 0, 0
    %s74 = scalar_select %p73, 0, 0
    %p75 = scmp.lt.s32.totalorder %s74, 0
    %s76 = scalar_select %p75, %s74, 0
    %s77 = scalar_lea.vmem %s2, %s76
    %p78 = scmp.eq.s32.totalorder 0, 0
    %s79 = scalar_select %p78, 0, 0
    %p80 = scmp.eq.s32.totalorder 0, 0
    %s81 = scalar_select %p80, 0, 0
    %p82 = scmp.lt.s32.totalorder %s81, 0
    %s83 = scalar_select %p82, %s81, 0
    %s84 = scalar_lea.vmem %s2, %s83
    %p85 = scmp.eq.s32.totalorder 0, 0
    %s86 = scalar_select %p85, 0, 0
    %p87 = scmp.eq.s32.totalorder 0, 0
    // Predicated region
    $region34: #{vision_head_forward.1} parent=1 // pred_check
      %p88 = pneg %p87
    $region35: #{vision_head_forward.1} parent=1 // pred_check_branch
      %90 = sbr.rel (%p88) target = $region37
    $region36: #{vision_head_forward.1} parent=1 // pred_region
      %v91 = vld [vmem:[#allocation4] sm:$0xff]
      %v92 = vld [vmem:[#allocation4 + $0x8] sm:$0xff]
      %v93 = vld [vmem:[#allocation7] sm:$0xff]
      %v94 = vld [vmem:[#allocation7 + $0x8] sm:$0xff]
      %v95 = vld [vmem:[#allocation7 + $0x10] sm:$0xff]
      %v96 = vld [vmem:[#allocation7 + $0x18] sm:$0xff]
      %v97 = vld [vmem:[%s84] sm:$0x1]
      %v99 = vlaneseq
      %v100 = vshrl.u32 %v99, 7
      %v101 = vsub.s32 0, %v100
      %v102 = vrot.slane %v97, %v101
      %vm104 = vcmask 261120
      %v106 = vsel %vm104, %v91, 0
      %v109 = vsel %vm104, %v92, 0
      %111 = vmatprep.subr.mxu0 0.0
      %112 = vmatpush1.msra.mxu0 %v93
      %113 = vmatprep.subr.mxu0 0.0
      %114 = vmatpush1.msra.mxu0 %v94
      %115 = vmatprep.subr.mxu0 0.0
      %116 = vmatpush1.msra.mxu0 %v95
      %117 = vmatprep.subr.mxu0 0.0
      %118 = vmatpush1.msra.mxu0 %v96
      %119 = vmatprep.subr.mxu0 0.0
      %120 = vmatpush1.msra.mxu0 0.0
      %121 = vmatprep.subr.mxu0 0.0
      %122 = vmatpush1.msra.mxu0 0.0
      %123 = vmatprep.subr.mxu0 0.0
      %124 = vmatpush1.msra.mxu0 0.0
      %125 = vmatprep.subr.mxu0 0.0
      %126 = vmatpush1.msra.mxu0 0.0
      %127 = vmatprep.subr.mxu0 0.0
      %128 = vmatpush1.msra.mxu0 0.0
      %129 = vmatprep.subr.mxu0 0.0
      %130 = vmatpush1.msra.mxu0 0.0
      %131 = vmatprep.subr.mxu0 0.0
      %132 = vmatpush1.msra.mxu0 0.0
      %133 = vmatprep.subr.mxu0 0.0
      %134 = vmatpush1.msra.mxu0 0.0
      %135 = vmatprep.subr.mxu0 0.0
      %136 = vmatpush1.msra.mxu0 0.0
      %137 = vmatprep.subr.mxu0 0.0
      %138 = vmatpush1.msra.mxu0 0.0
      %139 = vmatprep.subr.mxu0 0.0
      %140 = vmatpush1.msra.mxu0 0.0
      %141 = vmatprep.subr.mxu0 0.0
      %142 = vmatpush1.msra.mxu0 0.0
      %143 = vmatprep.subr.mxu0 0.0
      %144 = vmatpush1.msra.mxu0 0.0
      %145 = vmatprep.subr.mxu0 0.0
      %146 = vmatpush1.msra.mxu0 0.0
      %147 = vmatprep.subr.mxu0 0.0
      %148 = vmatpush1.msra.mxu0 0.0
      %149 = vmatprep.subr.mxu0 0.0
      %150 = vmatpush1.msra.mxu0 0.0
      %151 = vmatprep.subr.mxu0 0.0
      %152 = vmatpush1.msra.mxu0 0.0
      %153 = vmatprep.subr.mxu0 0.0
      %154 = vmatpush1.msra.mxu0 0.0
      %155 = vmatprep.subr.mxu0 0.0
      %156 = vmatpush1.msra.mxu0 0.0
      %157 = vmatprep.subr.mxu0 0.0
      %158 = vmatpush1.msra.mxu0 0.0
      %159 = vmatprep.subr.mxu0 0.0
      %160 = vmatpush1.msra.mxu0 0.0
      %161 = vmatprep.subr.mxu0 0.0
      %162 = vmatpush1.msra.mxu0 0.0
      %163 = vmatprep.subr.mxu0 0.0
      %164 = vmatpush1.msra.mxu0 0.0
      %165 = vmatprep.subr.mxu0 0.0
      %166 = vmatpush1.msra.mxu0 0.0
      %167 = vmatprep.subr.mxu0 0.0
      %168 = vmatpush1.msra.mxu0 0.0
      %169 = vmatprep.subr.mxu0 0.0
      %170 = vmatpush1.msra.mxu0 0.0
      %171 = vmatprep.subr.mxu0 0.0
      %172 = vmatpush1.msra.mxu0 0.0
      %173 = vmatprep.subr.mxu0 0.0
      %174 = vmatpush1.msra.mxu0 0.0
      %175 = vmatprep.mubr.f32.mxu0 0.0
      %176 = vmatmul.mubr.f32.gmra.mrb[0].mxu0 %v106
      %v177 = vpop.f32.mrb[0].mxu0
      %v178 = vadd.f32 %v102, %v177
      %v179 = vpop.f32.mrb[0].mxu0
      %180 = vmatprep.mubr.f32.mxu0 0.0
      %181 = vmatmul.mubr.f32.gmra.mrb[0].mxu0 %v109
      %v182 = vpop.f32.mrb[0].mxu0
      %v183 = vadd.f32 %v102, %v182
      %v184 = vpop.f32.mrb[0].mxu0
      %185 = vdwg.mxu0
      %v186 = vmul.f32 %v178, 0.5
      %v187 = vmul.f32 %v183, 0.5
      %v188 = vmul.f32 %v178, 0.70710677
      %v189 = vmul.f32 %v183, 0.70710677
      %v190 = verf.f32.pop %v188
      %v191 = verf.f32.pop %v189
      %v192 = vadd.f32 %v190, 1.0
      %v193 = vadd.f32 %v191, 1.0
      %v194 = vmul.f32 %v186, %v192
      %v195 = vmul.f32 %v187, %v193
      %s196 = smul.u32 0, 16
      %s197 = scalar_lea.vmem [#allocation2], %s196
      %vm198 = vcmask 523264
      %199 = vst.msk [vmem:[%s197] sm:$0xff] %vm198, %v194
      %200 = vst.msk [vmem:[%s197 + $0x8] sm:$0xff] %vm198, %v195
    $region37: #{vision_head_forward.1} parent=1 // pred_fallthru
      _
    %p201 = scmp.eq.s32.totalorder 0, 0
    // Predicated region
    $region38: #{vision_head_forward.1} parent=1 // pred_check
      %p202 = pneg %p201
    $region39: #{vision_head_forward.1} parent=1 // pred_check_branch
      %204 = sbr.rel (%p202) target = $region41
    $region40: #{vision_head_forward.1} parent=1 // pred_region
      %205 = vst [vmem:[#allocation3] sm:$0xff] 0.0
      %206 = vst [vmem:[#allocation3 + $0x8] sm:$0xff] 0.0
    $region41: #{vision_head_forward.1} parent=1 // pred_fallthru
      _
    %v207 = vld [vmem:[#allocation3] sm:$0xff]
    %v208 = vld [vmem:[#allocation3 + $0x8] sm:$0xff]
    %s209 = smul.u32 0, 16
    %s210 = scalar_lea.vmem [#allocation2], %s209
    %v211 = vld [vmem:[%s210] sm:$0xff]
    %v212 = vld [vmem:[%s210 + $0x8] sm:$0xff]
    %v213 = vld [vmem:[#allocation9] sm:$0xff]
    %v214 = vld [vmem:[#allocation9 + $0x8] sm:$0xff]
    %v215 = vld [vmem:[#allocation9 + $0x10] sm:$0xff]
    %v216 = vld [vmem:[#allocation9 + $0x18] sm:$0xff]
    %v217 = vld [vmem:[#allocation9 + $0x20] sm:$0xff]
    %v218 = vld [vmem:[#allocation9 + $0x28] sm:$0xff]
    %v219 = vld [vmem:[#allocation9 + $0x30] sm:$0xff]
    %v220 = vld [vmem:[#allocation9 + $0x38] sm:$0xff]
    %vm221 = vcmask 523264
    %v223 = vsel %vm221, %v211, 0
    %v226 = vsel %vm221, %v212, 0
    %228 = vmatprep.subr.mxu0 0.0
    %229 = vmatpush1.msra.mxu0 %v213
    %230 = vmatprep.subr.mxu0 0.0
    %231 = vmatpush1.msra.mxu0 %v214
    %232 = vmatprep.subr.mxu0 0.0
    %233 = vmatpush1.msra.mxu0 %v215
    %234 = vmatprep.subr.mxu0 0.0
    %235 = vmatpush1.msra.mxu0 %v216
    %236 = vmatprep.subr.mxu0 0.0
    %237 = vmatpush1.msra.mxu0 %v217
    %238 = vmatprep.subr.mxu0 0.0
    %239 = vmatpush1.msra.mxu0 %v218
    %240 = vmatprep.subr.mxu0 0.0
    %241 = vmatpush1.msra.mxu0 %v219
    %242 = vmatprep.subr.mxu0 0.0
    %243 = vmatpush1.msra.mxu0 %v220
    %244 = vmatprep.subr.mxu0 0.0
    %245 = vmatpush1.msra.mxu0 0.0
    %246 = vmatprep.subr.mxu0 0.0
    %247 = vmatpush1.msra.mxu0 0.0
    %248 = vmatprep.subr.mxu0 0.0
    %249 = vmatpush1.msra.mxu0 0.0
    %250 = vmatprep.subr.mxu0 0.0
    %251 = vmatpush1.msra.mxu0 0.0
    %252 = vmatprep.subr.mxu0 0.0
    %253 = vmatpush1.msra.mxu0 0.0
    %254 = vmatprep.subr.mxu0 0.0
    %255 = vmatpush1.msra.mxu0 0.0
    %256 = vmatprep.subr.mxu0 0.0
    %257 = vmatpush1.msra.mxu0 0.0
    %258 = vmatprep.subr.mxu0 0.0
    %259 = vmatpush1.msra.mxu0 0.0
    %260 = vmatprep.subr.mxu0 0.0
    %261 = vmatpush1.msra.mxu0 0.0
    %262 = vmatprep.subr.mxu0 0.0
    %263 = vmatpush1.msra.mxu0 0.0
    %264 = vmatprep.subr.mxu0 0.0
    %265 = vmatpush1.msra.mxu0 0.0
    %266 = vmatprep.subr.mxu0 0.0
    %267 = vmatpush1.msra.mxu0 0.0
    %268 = vmatprep.subr.mxu0 0.0
    %269 = vmatpush1.msra.mxu0 0.0
    %270 = vmatprep.subr.mxu0 0.0
    %271 = vmatpush1.msra.mxu0 0.0
    %272 = vmatprep.subr.mxu0 0.0
    %273 = vmatpush1.msra.mxu0 0.0
    %274 = vmatprep.subr.mxu0 0.0
    %275 = vmatpush1.msra.mxu0 0.0
    %276 = vmatprep.subr.mxu0 0.0
    %277 = vmatpush1.msra.mxu0 0.0
    %278 = vmatprep.subr.mxu0 0.0
    %279 = vmatpush1.msra.mxu0 0.0
    %280 = vmatprep.subr.mxu0 0.0
    %281 = vmatpush1.msra.mxu0 0.0
    %282 = vmatprep.subr.mxu0 0.0
    %283 = vmatpush1.msra.mxu0 0.0
    %284 = vmatprep.subr.mxu0 0.0
    %285 = vmatpush1.msra.mxu0 0.0
    %286 = vmatprep.subr.mxu0 0.0
    %287 = vmatpush1.msra.mxu0 0.0
    %288 = vmatprep.subr.mxu0 0.0
    %289 = vmatpush1.msra.mxu0 0.0
    %290 = vmatprep.subr.mxu0 0.0
    %291 = vmatpush1.msra.mxu0 0.0
    %292 = vmatprep.mubr.f32.mxu0 0.0
    %293 = vmatmul.mubr.f32.gmra.mrb[0].mxu0 %v223
    %v294 = vpop.f32.mrb[0].mxu0
    %v295 = vadd.f32 0.0, %v294
    %v296 = vpop.f32.mrb[0].mxu0
    %297 = vmatprep.mubr.f32.mxu0 0.0
    %298 = vmatmul.mubr.f32.gmra.mrb[0].mxu0 %v226
    %v299 = vpop.f32.mrb[0].mxu0
    %v300 = vadd.f32 0.0, %v299
    %v301 = vpop.f32.mrb[0].mxu0
    %302 = vdwg.mxu0
    %v303 = vadd.f32 %v207, %v295
    %v304 = vadd.f32 %v208, %v300
    %305 = vst [vmem:[#allocation3] sm:$0xff] %v303
    %306 = vst [vmem:[#allocation3 + $0x8] sm:$0xff] %v304
    // Predicated region
    $region42: #{vision_head_forward.1} parent=1 // pred_check
      %p307 = pneg %p201
    $region43: #{vision_head_forward.1} parent=1 // pred_check_branch
      %309 = sbr.rel (%p307) target = $region45
    $region44: #{vision_head_forward.1} parent=1 // pred_region
      %v310 = vld [vmem:[#allocation3] sm:$0xff]
      %v311 = vld [vmem:[#allocation3 + $0x8] sm:$0xff]
      %v312 = vld [vmem:[%s4] sm:$0x1]
      %v314 = vlaneseq
      %v315 = vshrl.u32 %v314, 7
      %v316 = vsub.s32 0, %v315
      %v317 = vrot.slane %v312, %v316
      %v319 = vadd.f32 %v310, %v317
      %v320 = vadd.f32 %v311, %v317
      %321 = vst [vmem:[#allocation10] sm:$0xff] %v319
      %322 = vst [vmem:[#allocation10 + $0x8] sm:$0xff] %v320
    $region45: #{vision_head_forward.1} parent=1 // pred_fallthru
      _
    // Predicated region
    $region46: #{vision_head_forward.1} parent=1 // pred_check
      _
    $region47: #{vision_head_forward.1} parent=1 // pred_check_branch
      %324 = sbr.rel (0) target = $region49
    $region48: #{vision_head_forward.1} parent=1 // pred_region
      %s326 = ssub.s32 256, 256
      %327 = vsyncadd [#allocation6], %s326
      %s328 = sshll.u32 [#allocation10], 4
      %s329 = int_to_ptr.vmem [resolvable:$true] %s328
      %334 = dma.vmem_to_hbm [thread:$0]  %s329, 256, %s5, [#allocation6], 128, 128, 8
    $region49: #{vision_head_forward.1} parent=1 // pred_fallthru
      _
    // Predicated region
    $region50: #{vision_head_forward.1} parent=1 // pred_check
      _
    $region51: #{vision_head_forward.1} parent=1 // pred_check_branch
      %336 = sbr.rel (0) target = $region53
    $region52: #{vision_head_forward.1} parent=1 // pred_region
      %337 = dma.done [#allocation6], 256
    $region53: #{vision_head_forward.1} parent=1 // pred_fallthru
      _
    %338 = vsyncpa [#allocation5], 1
    %339 = vsyncpa [#allocation8], 1
    %340 = vsyncpa [#allocation6], 1

</llo_original>
